<compile_context>
chip_gen: v6e
topology: v6e:2x2x1
jax: 0.10.0
libtpu: 0.0.40
codegen_flags: <defaults>
</compile_context>

<pallas_src>
import jax
import jax.numpy as jnp
from jax import lax
from jax.experimental import pallas as pl
from jax.experimental.pallas import tpu as pltpu

_LANES = 128
_EPS = 1e-7


def _round_up(x: int, m: int) -> int:
    return ((x + m - 1) // m) * m


def _round_down(x: int, m: int) -> int:
    return (x // m) * m


def _sublane_multiple(dtype) -> int:
    # Native sublane packing: 8 rows for 4-byte dtypes, 16 for bf16, 32 for int8.
    itemsize = jnp.dtype(dtype).itemsize
    return max(8, 32 // max(itemsize, 1))


def uad_loss(
    t: jax.Array,
    num_clients: int,
    *,
    tile_rows: int | None = None,
    vmem_tile_bytes: int = 2 * 1024 * 1024,
) -> jax.Array:
    """Pallas implementation of UADLoss.forward(t). t has shape (B, N)."""
    B, N = t.shape
    # (-1 / num_clients) * (1 / B): fold both constants into one final scale.
    scale = (-1.0 / float(num_clients)) / float(B)

    itemsize = jnp.dtype(t.dtype).itemsize
    m = _sublane_multiple(t.dtype)
    # VMEM footprint of one input row (lane-padded).
    bytes_per_row = _round_up(N, _LANES) * itemsize

    if B < m:
        # Block row-dim equal to full array dim is always legal.
        tb = B
    else:
        auto = max(m, _round_down(vmem_tile_bytes // bytes_per_row, m))
        tb = min(auto, _round_down(B, m))
        if tile_rows is not None:
            tb = min(tb, max(m, _round_up(tile_rows, m)))
        tb = max(m, tb)

    num_tiles = pl.cdiv(B, tb)
    # Only the last row-tile can contain out-of-bounds (undefined) rows.
    needs_mask = num_tiles * tb != B
    # Per-tile partial shape: one sublane-group of rows (pure VPU folding).
    acc_rows = 8 if tb % 8 == 0 else tb
    out_rows = num_tiles * acc_rows

    def kernel(x_ref, o_ref):
        i = pl.program_id(0)
        x = x_ref[...].astype(jnp.float32)      # (tb, N)
        logs = jnp.log(x + _EPS)

        def tile_partial(vals):
            if tb == acc_rows:
                return vals
            # (tb, N) -> (tb/acc_rows, acc_rows, N): layout-preserving split of
            # the major dim; the axis-0 sum lowers to vreg-vreg VPU adds.
            return jnp.sum(vals.reshape(tb // acc_rows, acc_rows, N), axis=0)

        if not needs_mask:
            o_ref[...] = tile_partial(logs)
        else:
            last = num_tiles - 1

            if num_tiles > 1:
                @pl.when(i < last)
                def _hot():
                    # Hot path: no mask arithmetic at all.
                    o_ref[...] = tile_partial(logs)

            @pl.when(i == last)
            def _tail():
                # Mask rows >= B (undefined padded rows of the partial block).
                # jnp.where discards any NaN/Inf produced by log of garbage.
                rows = lax.broadcasted_iota(jnp.int32, (tb, N), 0) + i * tb
                o_ref[...] = tile_partial(jnp.where(rows < B, logs, 0.0))

    partials = pl.pallas_call(
        kernel,
        out_shape=jax.ShapeDtypeStruct((out_rows, N), jnp.float32),
        grid_spec=pltpu.PrefetchScalarGridSpec(
            num_scalar_prefetch=0,
            grid=(num_tiles,),
            in_specs=[pl.BlockSpec((tb, N), lambda i: (i, 0))],
            out_specs=pl.BlockSpec((acc_rows, N), lambda i: (i, 0)),
        ),
        compiler_params=pltpu.CompilerParams(
            dimension_semantics=("parallel",),
        ),
        cost_estimate=pl.CostEstimate(
            flops=2 * B * N,
            transcendentals=B * N,
            bytes_accessed=B * N * itemsize + out_rows * N * 4,
        ),
    )(t)

    # Tiny combine of per-tile partials (endorsed by review for the multi-core
    # split): out_rows*N f32 elements, negligible vs. the input pass.
    return jnp.sum(partials, dtype=jnp.float32) * jnp.float32(scale)


def uad_loss_ref(t: jax.Array, num_clients: int) -> jax.Array:
    """Pure-JAX reference (mirrors the PyTorch forward exactly)."""
    eps = 1e-7
    t32 = t.astype(jnp.float32)
    batch_loss = (-1.0 / num_clients) * jnp.sum(jnp.log(t32 + eps), axis=1)
    return jnp.sum(batch_loss) / batch_loss.shape[0]


if __name__ == "__main__":
    num_clients = 4
    key = jax.random.PRNGKey(0)
    k1, k2, k3, k4, k5 = jax.random.split(key, 5)

    # 1) Small shape consistent with the module (batch of per-client scores):
    #    single tile, no masking.
    B, N = 8, 16
    t = jax.random.uniform(k1, (B, N), dtype=jnp.float32, minval=0.01, maxval=1.0)
    out = jax.block_until_ready(uad_loss(t, num_clients))
    ref = uad_loss_ref(t, num_clients)
    assert jnp.allclose(out, ref, rtol=1e-5, atol=1e-5), (out, ref)

    # 2) Multiple row tiles, evenly divisible (unmasked hot path on every tile).
    t2 = jax.random.uniform(k2, (16, 100), dtype=jnp.float32, minval=0.01, maxval=1.0)
    out2 = jax.block_until_ready(uad_loss(t2, num_clients, tile_rows=8))
    ref2 = uad_loss_ref(t2, num_clients)
    assert jnp.allclose(out2, ref2, rtol=1e-5, atol=1e-5), (out2, ref2)

    # 3) Multiple row tiles with a partial last block (last-tile-only masking).
    t3 = jax.random.uniform(k3, (37, 24), dtype=jnp.float32, minval=0.01, maxval=1.0)
    out3 = jax.block_until_ready(uad_loss(t3, num_clients, tile_rows=8))
    ref3 = uad_loss_ref(t3, num_clients)
    assert jnp.allclose(out3, ref3, rtol=1e-5, atol=1e-5), (out3, ref3)

    # 4) Batch smaller than one sublane group (block == full array).
    t4 = jax.random.uniform(k4, (5, 7), dtype=jnp.float32, minval=0.01, maxval=1.0)
    out4 = jax.block_until_ready(uad_loss(t4, num_clients))
    ref4 = uad_loss_ref(t4, num_clients)
    assert jnp.allclose(out4, ref4, rtol=1e-5, atol=1e-5), (out4, ref4)

    # 5) bfloat16 input (half the HBM bytes), f32 accumulation, masked tail.
    t5 = jax.random.uniform(k5, (29, 33), dtype=jnp.float32, minval=0.01, maxval=1.0)
    t5 = t5.astype(jnp.bfloat16)
    out5 = jax.block_until_ready(uad_loss(t5, num_clients, tile_rows=16))
    ref5 = uad_loss_ref(t5, num_clients)
    assert jnp.allclose(out5, ref5, rtol=1e-5, atol=1e-5), (out5, ref5)

    print("KERNEL_OK")
</pallas_src>

<mosaic_0001>
module attributes {stable_mosaic.version = 11 : i64} {
  func.func @kernel(%arg0: i32, %arg1: memref<8x16xf32, #tpu.memory_space<vmem>>, %arg2: memref<8x16xf32, #tpu.memory_space<vmem>>) attributes {dimension_semantics = [#tpu.dimension_semantics<parallel>], iteration_bounds = array<i64: 1>, scalar_prefetch = 0 : i64, scratch_operands = 0 : i64, tpu.core_type = #tpu.core_type<tc>, window_params = [{transform_indices = @transform_0, window_bounds = array<i64: 8, 16>}, {transform_indices = @transform_1, window_bounds = array<i64: 8, 16>}]} {
    %c0 = arith.constant 0 : index
    %c0_0 = arith.constant 0 : index
    %0 = vector.load %arg1[%c0, %c0_0] : memref<8x16xf32, #tpu.memory_space<vmem>>, vector<8x16xf32>
    %cst = arith.constant 1.000000e-07 : f32
    %1 = vector.broadcast %cst : f32 to vector<8x16xf32>
    %2 = arith.addf %0, %1 : vector<8x16xf32>
    %3 = math.log %2 : vector<8x16xf32>
    %c0_1 = arith.constant 0 : index
    %c0_2 = arith.constant 0 : index
    %4 = vector.load %arg2[%c0_1, %c0_2] : memref<8x16xf32, #tpu.memory_space<vmem>>, vector<8x16xf32>
    tpu.vector_store %arg2[%c0_1, %c0_2], %3 {strides = array<i32>} : memref<8x16xf32, #tpu.memory_space<vmem>>, vector<8x16xf32>,
    return
  }
  func.func @transform_0(%arg0: i32) -> (i32, i32) {
    %c0_i32 = arith.constant 0 : i32
    %c0_i32_0 = arith.constant 0 : i32
    return %arg0, %c0_i32 : i32, i32
  }
  func.func @transform_1(%arg0: i32) -> (i32, i32) {
    %c0_i32 = arith.constant 0 : i32
    %c0_i32_0 = arith.constant 0 : i32
    return %arg0, %c0_i32 : i32, i32
  }
}

</mosaic_0001>

<llo_original>
// kernel: tpu_custom_call.1
$region0: #{tpu_custom_call.1}
  #allocation0 [shape = 'u32[]', space=smem, size = 0x4, offset = 0x4, fixed_abs, tag = 'smem constant byte address 0x4 - core index']
  #allocation1 [shape = 'u32[144,128]{1,0:T(1,128)}', space=vmem, size = 0x12000, scoped, tag = 'internal scratch']
  %s0 = inlined_call_operand.hbm [shape: f32[8,16], index: 0, kind: input, shape index: {}]
  %s1 = inlined_call_operand.hbm [shape: f32[8,16], index: 1, kind: output, shape index: {}]
  %s2 = sld [smem:[#allocation0]]
  $region18: #{tpu_custom_call.1} parent=0
    _
  %s4 = ssub.s32 1, %s2
  %s5 = scalar_select 0, %s4, %s2
  $region1: #{tpu_custom_call.1} parent=0
    #allocation2 [shape = 'u8[4096]{0}', space=vmem, size = 0x1000, scoped, tag = 'input window, operand 0, single buffered']
    #allocation3 [shape = 's32[1]{0}', space=sflag, size = 0x4, scoped, tag = 'scoped memory for tpu_custom_call.1']
    #allocation4 [shape = 's32[1]{0}', space=sflag, size = 0x4, scoped, tag = 'scoped memory for tpu_custom_call.1']
    #allocation5 [shape = 'u8[4096]{0}', space=vmem, size = 0x1000, scoped, tag = 'output window, operand 0, single buffered']
    %6 = vsyncpa [#allocation3], 0
    %7 = vsyncpa [#allocation4], 0
    // Predicated region
    $region2: #{tpu_custom_call.1} parent=1 // pred_check
      _
    $region3: #{tpu_custom_call.1} parent=1 // pred_check_branch
      %9 = sbr.rel (0) target = $region5
    $region4: #{tpu_custom_call.1} parent=1 // pred_region
      %s11 = ssub.s32 128, 128
      %12 = vsyncadd [#allocation3], %s11
      %s14 = sshll.u32 [#allocation2], 4
      %s15 = int_to_ptr.vmem [resolvable:$true] %s14
      %17 = dma.hbm_to_vmem [thread:$0]  %s0, 128, %s15, [#allocation3]
    $region5: #{tpu_custom_call.1} parent=1 // pred_fallthru
      _
    // Predicated region
    $region6: #{tpu_custom_call.1} parent=1 // pred_check
      _
    $region7: #{tpu_custom_call.1} parent=1 // pred_check_branch
      %19 = sbr.rel (0) target = $region9
    $region8: #{tpu_custom_call.1} parent=1 // pred_region
      %20 = dma.done [#allocation3], 128
    $region9: #{tpu_custom_call.1} parent=1 // pred_fallthru
      _
    %v21 = vld [vmem:[#allocation2] sm:$0xff]
    %v22 = vadd.f32 %v21, 1e-07
    %v23 = vlog2.pop %v22
    %v24 = vmul.f32 %v23, 0.6931472
    %vm25 = vcmask 130048
    %26 = vst.msk [vmem:[#allocation5] sm:$0xff] %vm25, %v24
    // Predicated region
    $region10: #{tpu_custom_call.1} parent=1 // pred_check
      _
    $region11: #{tpu_custom_call.1} parent=1 // pred_check_branch
      %28 = sbr.rel (0) target = $region13
    $region12: #{tpu_custom_call.1} parent=1 // pred_region
      %s30 = ssub.s32 128, 128
      %31 = vsyncadd [#allocation4], %s30
      %s33 = sshll.u32 [#allocation5], 4
      %s34 = int_to_ptr.vmem [resolvable:$true] %s33
      %36 = dma.vmem_to_hbm [thread:$0]  %s34, 128, %s1, [#allocation4]
    $region13: #{tpu_custom_call.1} parent=1 // pred_fallthru
      _
    // Predicated region
    $region14: #{tpu_custom_call.1} parent=1 // pred_check
      _
    $region15: #{tpu_custom_call.1} parent=1 // pred_check_branch
      %38 = sbr.rel (0) target = $region17
    $region16: #{tpu_custom_call.1} parent=1 // pred_region
      %39 = dma.done [#allocation4], 128
    $region17: #{tpu_custom_call.1} parent=1 // pred_fallthru
      _
    %40 = vsyncpa [#allocation3], 1
    %41 = vsyncpa [#allocation4], 1

</llo_original>
